<compile_context>
chip_gen: v7x
topology: tpu7x:2x2x1
jax: 0.10.0
libtpu: 0.0.40
codegen_flags: <defaults>
</compile_context>

<pallas_src>
import jax
import jax.numpy as jnp
from jax.experimental import pallas as pl
from jax.experimental.pallas import tpu as pltpu

# ---------------- problem sizes (small, consistent with the module) ---------
N, C_IN, H, W = 2, 4, 16, 16
C_OUT = 8
KH = KW = 3
PAD = 1
STRIDE = 1
EPS = 1e-5
HP, WP = H + 2 * PAD, W + 2 * PAD
HW = H * W                      # 256  -> lane dim (multiple of 128)
KK = KH * KW * C_IN             # 36   -> per-image contraction dim
NKK = N * KK                    # 72   -> merged contraction dim (multiple of 8)
NCO = N * C_OUT                 # 16   -> merged output rows (n*C_OUT + c)


# ---------------- Pallas kernel ---------------------------------------------
def conv_block_kernel(cols_ref, w_ref, o_ref):
    # cols_ref: (NKK, HW)  stacked im2col patches for the whole batch
    # w_ref:    (NCO, NKK) block-diagonal conv weights
    # o_ref:    (NCO, HW)  lane-dense output, already flattened NCHW
    cols = cols_ref[...]
    w = w_ref[...]

    # Whole batch, whole 3x3 conv: ONE MXU matmul -> (16, 256).
    acc = jnp.dot(w, cols, preferred_element_type=jnp.float32)

    # (Conv bias omitted: cancelled exactly by the mean subtraction below.)

    # InstanceNorm2d (affine=False): per-(n, c) row stats over the spatial
    # lanes.  Single-pass statistics: var = E[x^2] - mean^2 (biased, as in
    # PyTorch InstanceNorm2d).
    inv_hw = 1.0 / HW
    s1 = jnp.sum(acc, axis=1, keepdims=True)            # (NCO, 1)
    s2 = jnp.sum(acc * acc, axis=1, keepdims=True)       # (NCO, 1)
    mean = s1 * inv_hw
    var = s2 * inv_hw - mean * mean
    normed = (acc - mean) * jax.lax.rsqrt(var + EPS)

    # ReLU (nn.ReLU(0.2): the 0.2 is the inplace flag, i.e. plain ReLU).
    o_ref[...] = jnp.maximum(normed, 0.0).astype(o_ref.dtype)


@jax.jit
def conv_block_forward(x_nchw, w_oihw, bias):
    """x_nchw: (N, C_IN, H, W) float32 -> (N, C_OUT, H, W) float32.

    `bias` is accepted for API parity with Conv2d(bias=True) but is unused:
    InstanceNorm2d(affine=False) subtracts the per-channel mean immediately
    after the conv, cancelling any per-channel constant exactly.
    """
    del bias  # mathematically a no-op before InstanceNorm2d(affine=False)

    # Reflect padding (matches padding_mode='reflect', padding=1).
    x_pad = jnp.pad(x_nchw, ((0, 0), (0, 0), (PAD, PAD), (PAD, PAD)),
                    mode="reflect")                               # (N, C_IN, HP, WP)

    # im2col, (kh, kw, c_in) tap order, lane-dense spatial last dim.
    taps = []
    for kh in range(KH):
        for kw in range(KW):
            taps.append(x_pad[:, :, kh:kh + H, kw:kw + W])        # (N, C_IN, H, W)
    cols = jnp.stack(taps, axis=1)                                # (N, KH*KW, C_IN, H, W)
    cols_all = cols.reshape(NKK, HW)                              # (72, 256): [img0; img1]

    # OIHW -> (C_OUT, KH, KW, C_IN) -> (C_OUT, KK), matching the cols order,
    # then block-diagonal (NCO, NKK) so the whole batch is one matmul.
    w2d = jnp.transpose(w_oihw, (0, 2, 3, 1)).reshape(C_OUT, KK).astype(jnp.float32)
    w_bd = jnp.zeros((NCO, NKK), jnp.float32)
    for n in range(N):
        w_bd = w_bd.at[n * C_OUT:(n + 1) * C_OUT, n * KK:(n + 1) * KK].set(w2d)

    out_flat = pl.pallas_call(
        conv_block_kernel,
        out_shape=jax.ShapeDtypeStruct((NCO, HW), jnp.float32),
        grid_spec=pltpu.PrefetchScalarGridSpec(
            num_scalar_prefetch=0,
            grid=(1,),                                   # batch merged: one step
            in_specs=[
                pl.BlockSpec((NKK, HW), lambda i: (0, 0)),
                pl.BlockSpec((NCO, NKK), lambda i: (0, 0)),
            ],
            out_specs=pl.BlockSpec((NCO, HW), lambda i: (0, 0)),
        ),
        compiler_params=pltpu.CompilerParams(
            dimension_semantics=("arbitrary",),
            # Let XLA fuse the pad/im2col producer into the cols input DMA if
            # it can (no-op otherwise); the weight stays a plain operand.
            allow_input_fusion=[True, False],
        ),
    )(cols_all, w_bd)

    # Rows are ordered n*C_OUT + c -> a free NCHW un-flatten, no transpose.
    return out_flat.reshape(N, C_OUT, H, W)


# ---------------- pure-JAX reference (for sanity check) ---------------------
def conv_block_reference(x_nchw, w_oihw, bias):
    x_pad = jnp.pad(x_nchw, ((0, 0), (0, 0), (PAD, PAD), (PAD, PAD)),
                    mode="reflect")
    y = jax.lax.conv_general_dilated(
        x_pad, w_oihw, window_strides=(STRIDE, STRIDE), padding="VALID",
        dimension_numbers=("NCHW", "OIHW", "NCHW"))
    y = y + bias.reshape(1, C_OUT, 1, 1)        # kept here to prove cancellation
    mean = jnp.mean(y, axis=(2, 3), keepdims=True)
    var = jnp.mean((y - mean) ** 2, axis=(2, 3), keepdims=True)
    y = (y - mean) * jax.lax.rsqrt(var + EPS)
    return jnp.maximum(y, 0.0)


if __name__ == "__main__":
    key = jax.random.PRNGKey(0)
    kx, kwt, kb = jax.random.split(key, 3)

    x = jax.random.normal(kx, (N, C_IN, H, W), dtype=jnp.float32)
    # Deterministic synthetic parameters (Conv2d weight OIHW + bias).
    fan_in = C_IN * KH * KW
    bound = 1.0 / (fan_in ** 0.5)
    w = jax.random.uniform(kwt, (C_OUT, C_IN, KH, KW),
                           minval=-bound, maxval=bound, dtype=jnp.float32)
    b = jax.random.uniform(kb, (C_OUT,),
                           minval=-bound, maxval=bound, dtype=jnp.float32)

    out = conv_block_forward(x, w, b)
    out = jax.block_until_ready(out)

    ref = conv_block_reference(x, w, b)
    assert out.shape == (N, C_OUT, H, W)
    assert jnp.allclose(out, ref, atol=1e-4, rtol=1e-4), "mismatch vs reference"

    # TODO(synk): ConvTranspose2d path (down=False) not implemented; this
    # kernel covers the default down=True ConvBlock configuration.
    print("KERNEL_OK")
</pallas_src>

<mosaic_0001>
module attributes {stable_mosaic.version = 11 : i64} {
  func.func @conv_block_kernel(%arg0: i32, %arg1: memref<72x256xf32, #tpu.memory_space<vmem>>, %arg2: memref<16x72xf32, #tpu.memory_space<vmem>>, %arg3: memref<16x256xf32, #tpu.memory_space<vmem>>) attributes {dimension_semantics = [#tpu.dimension_semantics<arbitrary>], iteration_bounds = array<i64: 1>, scalar_prefetch = 0 : i64, scratch_operands = 0 : i64, tpu.core_type = #tpu.core_type<tc>, window_params = [{pipeline_mode = #tpu.pipeline_mode<synchronous>, transform_indices = @transform_0, window_bounds = array<i64: 72, 256>}, {pipeline_mode = #tpu.pipeline_mode<synchronous>, transform_indices = @transform_1, window_bounds = array<i64: 16, 72>}, {pipeline_mode = #tpu.pipeline_mode<synchronous>, transform_indices = @transform_2, window_bounds = array<i64: 16, 256>}]} {
    %c0 = arith.constant 0 : index
    %c0_0 = arith.constant 0 : index
    %0 = vector.load %arg1[%c0, %c0_0] : memref<72x256xf32, #tpu.memory_space<vmem>>, vector<72x256xf32>
    %c0_1 = arith.constant 0 : index
    %c0_2 = arith.constant 0 : index
    %1 = vector.load %arg2[%c0_1, %c0_2] : memref<16x72xf32, #tpu.memory_space<vmem>>, vector<16x72xf32>
    %cst = arith.constant dense<0.000000e+00> : vector<16x256xf32>
    %2 = tpu.matmul %1, %0, %cst {dimension_numbers = #tpu.dot_dimension_numbers<[1], [0], [0], [1], [0, 0, 1, 1], [], []>} : vector<16x72xf32>, vector<72x256xf32>, vector<16x256xf32> -> vector<16x256xf32>
    %cst_3 = arith.constant dense<0.000000e+00> : vector<16xf32>
    %3 = vector.multi_reduction <add>, %2, %cst_3 [1] : vector<16x256xf32> to vector<16xf32>
    %4 = vector.shape_cast %3 : vector<16xf32> to vector<16x1xf32>
    %5 = arith.mulf %2, %2 : vector<16x256xf32>
    %cst_4 = arith.constant dense<0.000000e+00> : vector<16xf32>
    %6 = vector.multi_reduction <add>, %5, %cst_4 [1] : vector<16x256xf32> to vector<16xf32>
    %7 = vector.shape_cast %6 : vector<16xf32> to vector<16x1xf32>
    %cst_5 = arith.constant 3.906250e-03 : f32
    %8 = vector.broadcast %cst_5 : f32 to vector<16x1xf32>
    %9 = arith.mulf %4, %8 : vector<16x1xf32>
    %cst_6 = arith.constant 3.906250e-03 : f32
    %10 = vector.broadcast %cst_6 : f32 to vector<16x1xf32>
    %11 = arith.mulf %7, %10 : vector<16x1xf32>
    %12 = arith.mulf %9, %9 : vector<16x1xf32>
    %13 = arith.subf %11, %12 : vector<16x1xf32>
    %14 = vector.broadcast %9 : vector<16x1xf32> to vector<16x256xf32>
    %15 = arith.subf %2, %14 : vector<16x256xf32>
    %cst_7 = arith.constant 9.99999974E-6 : f32
    %16 = vector.broadcast %cst_7 : f32 to vector<16x1xf32>
    %17 = arith.addf %13, %16 : vector<16x1xf32>
    %18 = math.rsqrt %17 : vector<16x1xf32>
    %19 = vector.broadcast %18 : vector<16x1xf32> to vector<16x256xf32>
    %20 = arith.mulf %15, %19 : vector<16x256xf32>
    %cst_8 = arith.constant 0.000000e+00 : f32
    %21 = vector.broadcast %cst_8 : f32 to vector<16x256xf32>
    %22 = arith.maximumf %20, %21 : vector<16x256xf32>
    %c0_9 = arith.constant 0 : index
    %c0_10 = arith.constant 0 : index
    %23 = vector.load %arg3[%c0_9, %c0_10] : memref<16x256xf32, #tpu.memory_space<vmem>>, vector<16x256xf32>
    tpu.vector_store %arg3[%c0_9, %c0_10], %22 {strides = array<i32>} : memref<16x256xf32, #tpu.memory_space<vmem>>, vector<16x256xf32>,
    return
  }
  func.func @transform_0(%arg0: i32) -> (i32, i32) {
    %c0_i32 = arith.constant 0 : i32
    %c0_i32_0 = arith.constant 0 : i32
    %c0_i32_1 = arith.constant 0 : i32
    return %c0_i32, %c0_i32_0 : i32, i32
  }
  func.func @transform_1(%arg0: i32) -> (i32, i32) {
    %c0_i32 = arith.constant 0 : i32
    %c0_i32_0 = arith.constant 0 : i32
    %c0_i32_1 = arith.constant 0 : i32
    return %c0_i32, %c0_i32_0 : i32, i32
  }
  func.func @transform_2(%arg0: i32) -> (i32, i32) {
    %c0_i32 = arith.constant 0 : i32
    %c0_i32_0 = arith.constant 0 : i32
    %c0_i32_1 = arith.constant 0 : i32
    return %c0_i32, %c0_i32_0 : i32, i32
  }
}

</mosaic_0001>

<llo_original>
// kernel: conv_block_forward.1
$region0: #{conv_block_forward.1}
  #allocation0 [shape = 'u32[]', space=smem, size = 0x4, offset = 0x4, fixed_abs, tag = 'smem constant byte address 0x4 - core index']
  #allocation1 [shape = 'u32[144,128]{1,0:T(1,128)}', space=vmem, size = 0x12000, scoped, tag = 'internal scratch']
  %s0 = inlined_call_operand.vmem [shape: f32[72,256], index: 0, kind: input, shape index: {}]
  %s1 = inlined_call_operand.vmem [shape: f32[16,72], index: 1, kind: input, shape index: {}]
  %s2 = inlined_call_operand.vmem [shape: f32[16,256], index: 2, kind: output, shape index: {}]
  %s3 = sld [smem:[#allocation0]]
  $region18: #{conv_block_forward.1} parent=0
    _
  %s5 = ssub.s32 1, %s3
  %s6 = scalar_select 0, %s5, %s3
  // Predicated region
  $region2: #{conv_block_forward.1} parent=0 // pred_check
    _
  $region3: #{conv_block_forward.1} parent=0 // pred_check_branch
    %8 = sbr.rel (0) target = $region5
  $region4: #{conv_block_forward.1} parent=0 // pred_region
    _
  $region5: #{conv_block_forward.1} parent=0 // pred_fallthru
    _
  // Predicated region
  $region6: #{conv_block_forward.1} parent=0 // pred_check
    _
  $region7: #{conv_block_forward.1} parent=0 // pred_check_branch
    %10 = sbr.rel (0) target = $region9
  $region8: #{conv_block_forward.1} parent=0 // pred_region
    _
  $region9: #{conv_block_forward.1} parent=0 // pred_fallthru
    _
  %v11 = vld [vmem:[%s0] sm:$0xff]
  %v12 = vld [vmem:[%s0 + $0x8] sm:$0xff]
  %v13 = vld [vmem:[%s0 + $0x10] sm:$0xff]
  %v14 = vld [vmem:[%s0 + $0x18] sm:$0xff]
  %v15 = vld [vmem:[%s0 + $0x20] sm:$0xff]
  %v16 = vld [vmem:[%s0 + $0x28] sm:$0xff]
  %v17 = vld [vmem:[%s0 + $0x30] sm:$0xff]
  %v18 = vld [vmem:[%s0 + $0x38] sm:$0xff]
  %v19 = vld [vmem:[%s0 + $0x40] sm:$0xff]
  %v20 = vld [vmem:[%s0 + $0x48] sm:$0xff]
  %v21 = vld [vmem:[%s0 + $0x50] sm:$0xff]
  %v22 = vld [vmem:[%s0 + $0x58] sm:$0xff]
  %v23 = vld [vmem:[%s0 + $0x60] sm:$0xff]
  %v24 = vld [vmem:[%s0 + $0x68] sm:$0xff]
  %v25 = vld [vmem:[%s0 + $0x70] sm:$0xff]
  %v26 = vld [vmem:[%s0 + $0x78] sm:$0xff]
  %v27 = vld [vmem:[%s0 + $0x80] sm:$0xff]
  %v28 = vld [vmem:[%s0 + $0x88] sm:$0xff]
  %v29 = vld [vmem:[%s1] sm:$0xff]
  %v30 = vld [vmem:[%s1 + $0x8] sm:$0xff]
  %vm31 = vcmask 588800
  %v33 = vsel %vm31, %v29, 0
  %v36 = vsel %vm31, %v30, 0
  %38 = vmatprep.subr.mxu0 %v12
  %39 = vmatpush1.msra.mxu0 %v11
  %40 = vmatprep.subr.mxu0 %v14
  %41 = vmatpush1.msra.mxu0 %v13
  %42 = vmatprep.subr.mxu0 %v16
  %43 = vmatpush1.msra.mxu0 %v15
  %44 = vmatprep.subr.mxu0 %v18
  %45 = vmatpush1.msra.mxu0 %v17
  %46 = vmatprep.subr.mxu0 %v20
  %47 = vmatpush1.msra.mxu0 %v19
  %48 = vmatprep.subr.mxu0 %v22
  %49 = vmatpush1.msra.mxu0 %v21
  %50 = vmatprep.subr.mxu0 %v24
  %51 = vmatpush1.msra.mxu0 %v23
  %52 = vmatprep.subr.mxu0 %v26
  %53 = vmatpush1.msra.mxu0 %v25
  %54 = vmatprep.subr.mxu0 %v28
  %55 = vmatpush1.msra.mxu0 %v27
  %56 = vmatprep.subr.mxu0 0.0
  %57 = vmatpush1.msra.mxu0 0.0
  %58 = vmatprep.subr.mxu0 0.0
  %59 = vmatpush1.msra.mxu0 0.0
  %60 = vmatprep.subr.mxu0 0.0
  %61 = vmatpush1.msra.mxu0 0.0
  %62 = vmatprep.subr.mxu0 0.0
  %63 = vmatpush1.msra.mxu0 0.0
  %64 = vmatprep.subr.mxu0 0.0
  %65 = vmatpush1.msra.mxu0 0.0
  %66 = vmatprep.subr.mxu0 0.0
  %67 = vmatpush1.msra.mxu0 0.0
  %68 = vmatprep.subr.mxu0 0.0
  %69 = vmatpush1.msra.mxu0 0.0
  %70 = vmatprep.subr.mxu0 0.0
  %71 = vmatpush1.msra.mxu0 0.0
  %72 = vmatprep.subr.mxu0 0.0
  %73 = vmatpush1.msra.mxu0 0.0
  %74 = vmatprep.subr.mxu0 0.0
  %75 = vmatpush1.msra.mxu0 0.0
  %76 = vmatprep.subr.mxu0 0.0
  %77 = vmatpush1.msra.mxu0 0.0
  %78 = vmatprep.subr.mxu0 0.0
  %79 = vmatpush1.msra.mxu0 0.0
  %80 = vmatprep.subr.mxu0 0.0
  %81 = vmatpush1.msra.mxu0 0.0
  %82 = vmatprep.subr.mxu0 0.0
  %83 = vmatpush1.msra.mxu0 0.0
  %84 = vmatprep.subr.mxu0 0.0
  %85 = vmatpush1.msra.mxu0 0.0
  %86 = vmatprep.subr.mxu0 0.0
  %87 = vmatpush1.msra.mxu0 0.0
  %88 = vmatprep.subr.mxu0 0.0
  %89 = vmatpush1.msra.mxu0 0.0
  %90 = vmatprep.subr.mxu0 0.0
  %91 = vmatpush1.msra.mxu0 0.0
  %92 = vmatprep.subr.mxu0 0.0
  %93 = vmatpush1.msra.mxu0 0.0
  %94 = vmatprep.subr.mxu0 0.0
  %95 = vmatpush1.msra.mxu0 0.0
  %96 = vmatprep.subr.mxu0 0.0
  %97 = vmatpush1.msra.mxu0 0.0
  %98 = vmatprep.subr.mxu0 0.0
  %99 = vmatpush1.msra.mxu0 0.0
  %100 = vmatprep.subr.mxu0 0.0
  %101 = vmatpush1.msra.mxu0 0.0
  %102 = vmatprep.mubr.f32.mxu0 0.0
  %103 = vmatmul.mubr.f32.gmra.mrb[0].mxu0 %v33
  %v104 = vpop.f32.mrb[0].mxu0
  %v105 = vadd.f32 0.0, %v104
  %v106 = vpop.f32.mrb[0].mxu0
  %v107 = vadd.f32 0.0, %v106
  %108 = vmatprep.mubr.f32.mxu0 0.0
  %109 = vmatmul.mubr.f32.gmra.mrb[0].mxu0 %v36
  %v110 = vpop.f32.mrb[0].mxu0
  %v111 = vadd.f32 0.0, %v110
  %v112 = vpop.f32.mrb[0].mxu0
  %v113 = vadd.f32 0.0, %v112
  %114 = vdwg.mxu0
  %v115 = vadd.f32 %v105, %v107
  %116 = vadd.xlane.f32.xlu0 %v115
  %v117 = vpop.xlane.xlu0 %116
  %v118 = vadd.f32 %v111, %v113
  %119 = vadd.xlane.f32.xlu0 %v118
  %v120 = vpop.xlane.xlu0 %119
  %v121 = vmul.f32 %v105, %v105
  %v122 = vmul.f32 %v107, %v107
  %v123 = vmul.f32 %v111, %v111
  %v124 = vmul.f32 %v113, %v113
  %v125 = vadd.f32 %v121, %v122
  %126 = vadd.xlane.f32.xlu0 %v125
  %v127 = vpop.xlane.xlu0 %126
  %v128 = vadd.f32 %v123, %v124
  %129 = vadd.xlane.f32.xlu0 %v128
  %v130 = vpop.xlane.xlu0 %129
  %v131 = vmul.f32 %v117, 0.00390625
  %v132 = vmul.f32 %v120, 0.00390625
  %v133 = vmul.f32 %v127, 0.00390625
  %v134 = vmul.f32 %v130, 0.00390625
  %v135 = vmul.f32 %v131, %v131
  %v136 = vmul.f32 %v132, %v132
  %v137 = vsub.f32 %v133, %v135
  %v138 = vsub.f32 %v134, %v136
  %v139 = vsub.f32 %v105, %v131
  %v140 = vsub.f32 %v107, %v131
  %v141 = vsub.f32 %v111, %v132
  %v142 = vsub.f32 %v113, %v132
  %v143 = vadd.f32 %v137, 1e-05
  %v144 = vadd.f32 %v138, 1e-05
  %v145 = vrsqrt.pop %v143
  %v146 = vrsqrt.pop %v144
  %v147 = vmul.f32 %v139, %v145
  %v148 = vmul.f32 %v140, %v145
  %v149 = vmul.f32 %v141, %v146
  %v150 = vmul.f32 %v142, %v146
  %v151 = vmax.f32 %v147, 0.0
  %v152 = vmax.f32 %v148, 0.0
  %v153 = vmax.f32 %v149, 0.0
  %v154 = vmax.f32 %v150, 0.0
  %155 = vst [vmem:[%s2] sm:$0xff] %v151
  %156 = vst [vmem:[%s2 + $0x8] sm:$0xff] %v152
  %157 = vst [vmem:[%s2 + $0x10] sm:$0xff] %v153
  %158 = vst [vmem:[%s2 + $0x18] sm:$0xff] %v154
  // Predicated region
  $region10: #{conv_block_forward.1} parent=0 // pred_check
    _
  $region11: #{conv_block_forward.1} parent=0 // pred_check_branch
    %160 = sbr.rel (0) target = $region13
  $region12: #{conv_block_forward.1} parent=0 // pred_region
    _
  $region13: #{conv_block_forward.1} parent=0 // pred_fallthru
    _
  // Predicated region
  $region14: #{conv_block_forward.1} parent=0 // pred_check
    _
  $region15: #{conv_block_forward.1} parent=0 // pred_check_branch
    %162 = sbr.rel (0) target = $region17
  $region16: #{conv_block_forward.1} parent=0 // pred_region
    _
  $region17: #{conv_block_forward.1} parent=0 // pred_fallthru
    _

</llo_original>
